<compile_context>
chip_gen: v7x
topology: tpu7x:2x2x1
jax: 0.10.0
libtpu: 0.0.40
codegen_flags: <defaults>
</compile_context>

<pallas_src>
import jax
import jax.numpy as jnp
from jax.experimental import pallas as pl
from jax.experimental.pallas import tpu as pltpu


# ----------------------------------------------------------------------------
# small helpers
# ----------------------------------------------------------------------------
def _round_up(x, m):
    return ((x + m - 1) // m) * m


def _query_vmem_capacity_bytes():
    """Physical VMEM per TensorCore; conservative 64 MiB fallback (v7x-safe)."""
    try:
        info = pltpu.get_tpu_info()
        cap = getattr(info, "vmem_capacity_bytes", None)
        if cap:
            return int(cap)
    except Exception:
        pass
    return 64 * 1024 * 1024


def _pick_row_block(total_rows, bytes_per_row, budget_bytes, cap=2048):
    """Largest multiple of 8 that divides total_rows and fits the VMEM budget."""
    limit = budget_bytes // max(1, bytes_per_row)
    limit = min(limit, total_rows, cap)
    limit = max(8, (limit // 8) * 8)
    d = limit
    while d > 8 and total_rows % d != 0:
        d -= 8
    return d


# ----------------------------------------------------------------------------
# quant / dequant math
# ----------------------------------------------------------------------------
def _per_token_qdq_kernel_math(x, bits, sym, clip_ratio):
    """Row-wise quant-dequant; per-row reciprocal so bulk work is VALU mults."""
    maxq = float(2 ** (bits - 1) - 1) if sym else float(2 ** bits - 1)
    rmin = jnp.minimum(jnp.min(x, axis=-1, keepdims=True), 0.0) * clip_ratio
    rmax = jnp.maximum(jnp.max(x, axis=-1, keepdims=True), 0.0) * clip_ratio
    if sym:
        mx = jnp.maximum(jnp.abs(rmin), rmax)
        scale = jnp.where(mx == 0.0, 1.0, mx / maxq)
        inv = 1.0 / scale                                   # (rows, 1): cheap
        q = jnp.clip(jnp.round(x * inv), -(maxq + 1.0), maxq)
        return scale * q
    both0 = (rmin == 0.0) & (rmax == 0.0)
    rmin = jnp.where(both0, -1.0, rmin)
    rmax = jnp.where(both0, 1.0, rmax)
    scale = (rmax - rmin) / maxq
    inv = 1.0 / scale
    zero = jnp.round(-rmin * inv)
    q = jnp.clip(jnp.round(x * inv) + zero, 0.0, maxq)
    return scale * (q - zero)


def _per_token_qdq_ref(x, bits, sym, clip_ratio):
    """Division-based reference (faithful to the PyTorch code)."""
    maxq = float(2 ** (bits - 1) - 1) if sym else float(2 ** bits - 1)
    rmin = jnp.minimum(jnp.min(x, axis=-1, keepdims=True), 0.0) * clip_ratio
    rmax = jnp.maximum(jnp.max(x, axis=-1, keepdims=True), 0.0) * clip_ratio
    if sym:
        mx = jnp.maximum(jnp.abs(rmin), rmax)
        scale = jnp.where(mx == 0.0, 1.0, mx / maxq)
        q = jnp.clip(jnp.round(x / scale), -(maxq + 1.0), maxq)
        return scale * q
    both0 = (rmin == 0.0) & (rmax == 0.0)
    rmin = jnp.where(both0, -1.0, rmin)
    rmax = jnp.where(both0, 1.0, rmax)
    scale = (rmax - rmin) / maxq
    zero = jnp.round(-rmin / scale)
    q = jnp.clip(jnp.round(x / scale) + zero, 0.0, maxq)
    return scale * (q - zero)


def _per_tensor_sym_qdq(x, bits, clip_ratio):
    """Symmetric per-tensor quant-dequant (asym per-tensor exits in the ref)."""
    maxq = float(2 ** (bits - 1) - 1)
    xf = x.astype(jnp.float32)
    xmax = jnp.amax(xf) * clip_ratio
    xmin = jnp.amin(xf) * clip_ratio
    xmax = jnp.maximum(jnp.abs(xmin), xmax)
    scale = jnp.where(xmax == 0.0, 1.0, xmax / maxq)
    q = jnp.clip(jnp.round(xf / scale), -(maxq + 1.0), maxq)
    return (scale * q).astype(x.dtype)


# ----------------------------------------------------------------------------
# Pallas kernel 1: input quant pre-pass.
# One read of x -> per-token (or supplied per-tensor) scale/zero, bf16 q levels,
# packed (rows, 2) [scale, scale*zero] sidecar for the GEMM finalize.
# ----------------------------------------------------------------------------
def _make_input_quant_kernel(bits, sym, clip_ratio, per_tensor):
    maxq = float(2 ** (bits - 1) - 1) if sym else float(2 ** bits - 1)

    def kernel(*refs):
        if per_tensor:
            x_ref, s_ref, q_ref, sz_ref = refs
        else:
            x_ref, q_ref, sz_ref = refs
        x = x_ref[...].astype(jnp.float32)
        rows = x.shape[0]
        if per_tensor:
            scale = jnp.broadcast_to(s_ref[...].astype(jnp.float32), (rows, 1))
            zero = jnp.zeros((rows, 1), jnp.float32)
        else:
            rmin = jnp.minimum(jnp.min(x, axis=-1, keepdims=True), 0.0) * clip_ratio
            rmax = jnp.maximum(jnp.max(x, axis=-1, keepdims=True), 0.0) * clip_ratio
            if sym:
                mx = jnp.maximum(jnp.abs(rmin), rmax)
                scale = jnp.where(mx == 0.0, 1.0, mx / maxq)
                zero = jnp.zeros_like(scale)
            else:
                both0 = (rmin == 0.0) & (rmax == 0.0)
                rmin = jnp.where(both0, -1.0, rmin)
                rmax = jnp.where(both0, 1.0, rmax)
                scale = (rmax - rmin) / maxq
                zero = jnp.round(-rmin * (1.0 / scale))
        inv = 1.0 / scale                                   # (rows, 1) only
        if sym or per_tensor:
            q = jnp.clip(jnp.round(x * inv), -(maxq + 1.0), maxq)
        else:
            q = jnp.clip(jnp.round(x * inv) + zero, 0.0, maxq)
        q_ref[...] = q.astype(q_ref.dtype)
        sz_ref[...] = jnp.concatenate([scale, scale * zero], axis=-1)

    return kernel


# ----------------------------------------------------------------------------
# Pallas kernel 2: K-tiled GEMM with f32 VMEM accumulator.
# Finalize applies per-row dequant scale, zero-point correction via colsum,
# bias, and (optionally) a fused per-token output quant-dequant.
# ----------------------------------------------------------------------------
def _make_gemm_kernel(quant_in, zero_correct, has_bias, out_qdq):
    def kernel(*refs):
        a_ref, wt_ref = refs[0], refs[1]
        idx = 2
        sz_ref = colsum_ref = bias_ref = None
        if quant_in:
            sz_ref = refs[idx]
            idx += 1
            if zero_correct:
                colsum_ref = refs[idx]
                idx += 1
        if has_bias:
            bias_ref = refs[idx]
            idx += 1
        o_ref = refs[idx]
        acc_ref = refs[idx + 1]

        k = pl.program_id(2)

        @pl.when(k == 0)
        def _init():
            acc_ref[...] = jnp.zeros_like(acc_ref)

        acc_ref[...] += jnp.dot(a_ref[...], wt_ref[...],
                                preferred_element_type=jnp.float32)

        @pl.when(k == pl.num_programs(2) - 1)
        def _finalize():
            y = acc_ref[...]
            if quant_in:
                y = y * sz_ref[:, 0:1]
                if zero_correct:
                    # dequant(x) @ W^T = s*(q @ W^T) - (s*z) * colsum(W^T)
                    y = y - sz_ref[:, 1:2] * colsum_ref[...]
            if has_bias:
                y = y + bias_ref[...]
            if out_qdq is not None:
                y = _per_token_qdq_kernel_math(y, *out_qdq)
            o_ref[...] = y.astype(o_ref.dtype)

    return kernel


# ----------------------------------------------------------------------------
# Pallas kernel 3: standalone per-token output quant-dequant epilogue.
# ----------------------------------------------------------------------------
def _make_out_qdq_kernel(bits, sym, clip_ratio):
    def kernel(y_ref, o_ref):
        y = y_ref[...].astype(jnp.float32)
        o_ref[...] = _per_token_qdq_kernel_math(
            y, bits, sym, clip_ratio).astype(o_ref.dtype)
    return kernel


# ----------------------------------------------------------------------------
# ActQuantWrapper equivalent
# ----------------------------------------------------------------------------
class ActQuantWrapper:
    """JAX/Pallas port of quantize.gptq.ActQuantWrapper around an nn.Linear."""

    def __init__(self, weight, bias=None, *, tile_m=None, tile_n=None, tile_k=None,
                 fuse_out_max_n=2048, fp_compute_dtype=None):
        self.weight = jnp.asarray(weight)          # (out_features, in_features)
        self.bias = None if bias is None else jnp.asarray(bias)

        vmem_cap = _query_vmem_capacity_bytes()
        # ~75% of physical VMEM: ~96 MiB on v5e/v6e (128 MiB), ~48 MiB on v7x.
        self.vmem_limit = int(min(vmem_cap * 3 // 4, 100 * 1024 * 1024))
        big_vmem = vmem_cap >= 100 * 1024 * 1024
        self.tile_m = tile_m if tile_m is not None else 512
        self.tile_n = tile_n if tile_n is not None else (1024 if big_vmem else 512)
        self.tile_k = tile_k if tile_k is not None else 1024
        assert self.tile_m % 8 == 0 and self.tile_n % 128 == 0 and self.tile_k % 128 == 0

        # Fuse the per-token output qdq into the GEMM finalize when Np <= this.
        self.fuse_out_max_n = fuse_out_max_n
        # Opt-in bf16 MXU for the unquantized (bits=16) f32 path; None = exact.
        self.fp_compute_dtype = fp_compute_dtype

        # Quantizer defaults match ActQuantizer.__init__: bits=16 -> passthrough.
        self.in_cfg = dict(bits=16, sym=False, clip_ratio=1.0, act_quant="per-tensor")
        self.out_cfg = dict(bits=16, sym=False, clip_ratio=1.0, act_quant="per-tensor")
        self._w_cache = {}   # (dtype, Kp, Np) -> (W^T padded, colsum f32)
        self._b_cache = {}   # Np -> padded f32 bias row
        # TODO(synk): online_full_had / online_partial_had Hadamard rotation paths
        # (external hadamard_utils / fast_hadamard_transform) are not ported.
        # TODO(synk): true int8 MXU path (v5e/v6e) needs int8 weights; the wrapped
        # Linear keeps floating-point weights, so bf16 q-levels are used instead.

    # -- configuration (mirrors ActQuantizer.configure) -----------------------
    def configure_input(self, bits, groupsize=-1, sym=False, clip_ratio=1.0,
                        act_quant="per-token"):
        assert 0.0 < clip_ratio <= 1.0
        if groupsize > 0:
            # TODO(synk): find_params_per_token_groupwise path not implemented.
            raise NotImplementedError("groupwise per-token act quant not supported")
        self.in_cfg = dict(bits=bits, sym=sym, clip_ratio=clip_ratio,
                           act_quant=act_quant)

    def configure_output(self, bits, groupsize=-1, sym=False, clip_ratio=1.0,
                         act_quant="per-token"):
        assert 0.0 < clip_ratio <= 1.0
        if groupsize > 0:
            # TODO(synk): find_params_per_token_groupwise path not implemented.
            raise NotImplementedError("groupwise per-token act quant not supported")
        self.out_cfg = dict(bits=bits, sym=sym, clip_ratio=clip_ratio,
                            act_quant=act_quant)

    # -- cached weight / bias preparation (no per-forward transpose) ----------
    def _prepare_weight(self, mxu_dtype, Kp, Np):
        key = (jnp.dtype(mxu_dtype).name, Kp, Np)
        ent = self._w_cache.get(key)
        if ent is None:
            wt = self.weight.T.astype(mxu_dtype)                 # (K, N)
            K, N = wt.shape
            if (K, N) != (Kp, Np):
                wt = jnp.pad(wt, ((0, Kp - K), (0, Np - N)))
            colsum = jnp.sum(wt.astype(jnp.float32), axis=0, keepdims=True)
            ent = (wt, colsum)
            self._w_cache[key] = ent
        return ent

    def _prepare_bias(self, Np):
        if self.bias is None:
            return None
        ent = self._b_cache.get(Np)
        if ent is None:
            b = self.bias.astype(jnp.float32).reshape(1, -1)
            if b.shape[1] != Np:
                b = jnp.pad(b, ((0, 0), (0, Np - b.shape[1])))
            self._b_cache[Np] = b
            ent = b
        return ent

    # -- input quant pre-pass (one Pallas read of x) ---------------------------
    def _input_quant_prepass(self, x2p, scale_pt, bits, sym, clip_ratio, q_dtype):
        Tp, Kp = x2p.shape
        per_tensor = scale_pt is not None
        bytes_per_row = Kp * (x2p.dtype.itemsize + jnp.dtype(q_dtype).itemsize) * 2 + 64
        tm_q = _pick_row_block(Tp, bytes_per_row, budget_bytes=self.vmem_limit // 2)
        kernel = _make_input_quant_kernel(bits, sym, clip_ratio, per_tensor)

        in_specs = [pl.BlockSpec((tm_q, Kp), lambda i: (i, 0))]
        args = [x2p]
        if per_tensor:
            in_specs.append(pl.BlockSpec((1, 1), lambda i: (0, 0)))
            args.append(scale_pt)

        q, sz = pl.pallas_call(
            kernel,
            out_shape=(jax.ShapeDtypeStruct((Tp, Kp), q_dtype),
                       jax.ShapeDtypeStruct((Tp, 2), jnp.float32)),
            grid_spec=pltpu.PrefetchScalarGridSpec(
                num_scalar_prefetch=0,
                grid=(Tp // tm_q,),
                in_specs=in_specs,
                out_specs=(pl.BlockSpec((tm_q, Kp), lambda i: (i, 0)),
                           pl.BlockSpec((tm_q, 2), lambda i: (i, 0))),
            ),
            compiler_params=pltpu.CompilerParams(
                dimension_semantics=("parallel",),
                vmem_limit_bytes=self.vmem_limit,
            ),
        )(*args)
        return q, sz

    # -- standalone output-qdq epilogue ----------------------------------------
    def _out_qdq_epilogue(self, y, out_cfg):
        Tp, Np = y.shape
        bytes_per_row = Np * y.dtype.itemsize * 4 + 64
        tm_e = _pick_row_block(Tp, bytes_per_row, budget_bytes=self.vmem_limit // 2)
        kernel = _make_out_qdq_kernel(out_cfg["bits"], bool(out_cfg["sym"]),
                                      float(out_cfg["clip_ratio"]))
        return pl.pallas_call(
            kernel,
            out_shape=jax.ShapeDtypeStruct((Tp, Np), y.dtype),
            grid_spec=pltpu.PrefetchScalarGridSpec(
                num_scalar_prefetch=0,
                grid=(Tp // tm_e,),
                in_specs=[pl.BlockSpec((tm_e, Np), lambda i: (i, 0))],
                out_specs=pl.BlockSpec((tm_e, Np), lambda i: (i, 0)),
            ),
            compiler_params=pltpu.CompilerParams(
                dimension_semantics=("parallel",),
                vmem_limit_bytes=self.vmem_limit,
            ),
        )(y)

    # -- forward ---------------------------------------------------------------
    def __call__(self, x):
        x_dtype = x.dtype
        init_shape = x.shape
        K = init_shape[-1]
        x2 = x.reshape(-1, K)
        T = x2.shape[0]
        N, Kw = self.weight.shape
        assert Kw == K, (Kw, K)

        in_cfg, out_cfg = dict(self.in_cfg), dict(self.out_cfg)

        quant_in = in_cfg["bits"] < 16
        per_tensor_in = quant_in and in_cfg["act_quant"] == "per-tensor"
        if per_tensor_in:
            assert in_cfg["sym"], "asym per-tensor act quant exits in the reference"
        sym_in = bool(in_cfg["sym"]) or per_tensor_in

        quant_out = out_cfg["bits"] < 16
        out_per_token = quant_out and out_cfg["act_quant"] == "per-token"
        if quant_out and not out_per_token:
            assert out_cfg["sym"], "asym per-tensor act quant exits in the reference"

        # MXU operand dtype: quant levels are exact in bf16 up to 8 bits.
        if quant_in:
            mxu_dtype = jnp.bfloat16 if in_cfg["bits"] <= 8 else jnp.float32
        else:
            mxu_dtype = (jnp.dtype(self.fp_compute_dtype)
                         if self.fp_compute_dtype is not None else x_dtype)

        # ---- tiling: cdiv + zero padding -------------------------------------
        tm = min(self.tile_m, _round_up(T, 8))
        tk = min(self.tile_k, _round_up(K, 128))
        Nr = _round_up(N, 128)
        fuse_out = out_per_token and Nr <= self.fuse_out_max_n
        if fuse_out:
            tn = Nr                      # single j tile: finalize sees full rows
        else:
            tn = min(self.tile_n, Nr)
            # keep >= 2 blocks along a parallel axis (v7x: 2 TensorCores/chip)
            if _round_up(T, tm) // tm == 1 and Nr // tn == 1 and Nr >= 256:
                tn = _round_up((N + 1) // 2, 128)
        Tp, Np, Kp = _round_up(T, tm), _round_up(N, tn), _round_up(K, tk)

        x2p = x2 if (Tp == T and Kp == K) else jnp.pad(
            x2, ((0, Tp - T), (0, Kp - K)))
        wtp, colsum = self._prepare_weight(mxu_dtype, Kp, Np)
        biasp = self._prepare_bias(Np)
        has_bias = biasp is not None

        # ---- hoisted input quantization (Pallas pre-pass) ---------------------
        sz = None
        if quant_in:
            clip = float(in_cfg["clip_ratio"])
            scale_pt = None
            if per_tensor_in:
                maxq_in = float(2 ** (in_cfg["bits"] - 1) - 1)
                xf = x2.astype(jnp.float32)        # unpadded, matches the reference
                xmax = jnp.amax(xf) * clip
                xmin = jnp.amin(xf) * clip
                xmax = jnp.maximum(jnp.abs(xmin), xmax)
                scale_pt = jnp.where(xmax == 0.0, 1.0, xmax / maxq_in).reshape(1, 1)
            a, sz = self._input_quant_prepass(x2p, scale_pt, in_cfg["bits"],
                                              sym_in, clip, mxu_dtype)
        else:
            a = x2p.astype(mxu_dtype) if x2p.dtype != jnp.dtype(mxu_dtype) else x2p

        # ---- GEMM pallas_call --------------------------------------------------
        out_qdq = ((out_cfg["bits"], bool(out_cfg["sym"]),
                    float(out_cfg["clip_ratio"])) if fuse_out else None)
        kernel = _make_gemm_kernel(quant_in, quant_in and not sym_in,
                                   has_bias, out_qdq)

        in_specs = [
            pl.BlockSpec((tm, tk), lambda i, j, k: (i, k)),      # activations (q)
            pl.BlockSpec((tk, tn), lambda i, j, k: (k, j)),      # W^T
        ]
        args = [a, wtp]
        if quant_in:
            in_specs.append(pl.BlockSpec((tm, 2), lambda i, j, k: (i, 0)))   # [s, s*z]
            args.append(sz)
            if not sym_in:
                in_specs.append(pl.BlockSpec((1, tn), lambda i, j, k: (0, j)))  # colsum
                args.append(colsum)
        if has_bias:
            in_specs.append(pl.BlockSpec((1, tn), lambda i, j, k: (0, j)))
            args.append(biasp)

        y = pl.pallas_call(
            kernel,
            out_shape=jax.ShapeDtypeStruct((Tp, Np), x_dtype),
            grid_spec=pltpu.PrefetchScalarGridSpec(
                num_scalar_prefetch=0,
                grid=(Tp // tm, Np // tn, Kp // tk),
                in_specs=in_specs,
                out_specs=pl.BlockSpec((tm, tn), lambda i, j, k: (i, j)),
                scratch_shapes=[pltpu.VMEM((tm, tn), jnp.float32)],
            ),
            compiler_params=pltpu.CompilerParams(
                dimension_semantics=("parallel", "parallel", "arbitrary"),
                vmem_limit_bytes=self.vmem_limit,
            ),
        )(*args)

        # ---- output quantization ----------------------------------------------
        if quant_out and not fuse_out:
            if out_per_token:
                y = self._out_qdq_epilogue(y, out_cfg)[:T, :N]
            else:
                # Per-tensor output scale needs the whole output first (two-pass):
                # tiny global reduction left as plain-JAX glue.
                y = _per_tensor_sym_qdq(y[:T, :N], out_cfg["bits"],
                                        float(out_cfg["clip_ratio"]))
        else:
            y = y[:T, :N]

        return y.reshape(*init_shape[:-1], N).astype(x_dtype)


# ----------------------------------------------------------------------------
# Pure-JAX reference (mirrors the PyTorch forward) for correctness checks.
# ----------------------------------------------------------------------------
def reference_forward(x, weight, bias, in_cfg, out_cfg):
    K = x.shape[-1]
    x2 = x.astype(jnp.float32).reshape(-1, K)
    if in_cfg["bits"] < 16:
        if in_cfg["act_quant"] == "per-tensor":
            x2 = _per_tensor_sym_qdq(x2, in_cfg["bits"], in_cfg["clip_ratio"])
        else:
            x2 = _per_token_qdq_ref(x2, in_cfg["bits"], in_cfg["sym"],
                                    in_cfg["clip_ratio"])
    y = jnp.dot(x2, weight.astype(jnp.float32).T,
                precision=jax.lax.Precision.HIGHEST)
    if bias is not None:
        y = y + bias.astype(jnp.float32)
    if out_cfg["bits"] < 16:
        if out_cfg["act_quant"] == "per-tensor":
            y = _per_tensor_sym_qdq(y, out_cfg["bits"], out_cfg["clip_ratio"])
        else:
            y = _per_token_qdq_ref(y, out_cfg["bits"], out_cfg["sym"],
                                   out_cfg["clip_ratio"])
    return y.reshape(*x.shape[:-1], weight.shape[0]).astype(x.dtype)


if __name__ == "__main__":
    key = jax.random.PRNGKey(0)
    kx, kw, kb, kx2, kw2, kb2 = jax.random.split(key, 6)

    # Small shapes that still exercise a multi-tile grid (K and N tiling).
    batch, seq, hidden, out_features = 2, 8, 256, 256
    x = jax.random.normal(kx, (batch, seq, hidden), jnp.float32)
    weight = jax.random.normal(kw, (out_features, hidden), jnp.float32) * 0.05
    bias = jax.random.normal(kb, (out_features,), jnp.float32) * 0.1

    # Small tile overrides so the test drives a multi-block grid with accumulation.
    wrapper = ActQuantWrapper(weight, bias, tile_m=256, tile_n=128, tile_k=128)
    cfg16 = dict(bits=16, sym=False, clip_ratio=1.0, act_quant="per-tensor")

    # 1) Default (both quantizers at 16 bits): plain Linear, f32 MXU path.
    y_fp = jax.block_until_ready(wrapper(x))
    y_fp_ref = reference_forward(x, weight, bias, cfg16, cfg16)
    assert y_fp.shape == (batch, seq, out_features)
    assert jnp.allclose(y_fp, y_fp_ref, atol=1e-3, rtol=1e-3), \
        float(jnp.max(jnp.abs(y_fp - y_fp_ref)))

    # 2) 8-bit asymmetric per-token input quant: hoisted bf16 q pre-pass +
    #    zero-point correction via colsum.  Tolerance covers bf16 weight rounding.
    wrapper.configure_input(bits=8, sym=False, clip_ratio=1.0, act_quant="per-token")
    y_q = jax.block_until_ready(wrapper(x))
    y_q_ref = reference_forward(x, weight, bias, wrapper.in_cfg, wrapper.out_cfg)
    assert jnp.allclose(y_q, y_q_ref, atol=2e-2, rtol=2e-2), \
        float(jnp.max(jnp.abs(y_q - y_q_ref)))

    # 3) 8-bit symmetric per-token input + 8-bit symmetric per-token output quant,
    #    output qdq fused into the GEMM finalize (single j tile).
    wrapper.configure_input(bits=8, sym=True, clip_ratio=1.0, act_quant="per-token")
    wrapper.configure_output(bits=8, sym=True, clip_ratio=1.0, act_quant="per-token")
    y_q2 = jax.block_until_ready(wrapper(x))
    y_q2_ref = reference_forward(x, weight, bias, wrapper.in_cfg, wrapper.out_cfg)
    assert jnp.allclose(y_q2, y_q2_ref, atol=6e-2, rtol=2e-2), \
        float(jnp.max(jnp.abs(y_q2 - y_q2_ref)))

    # 4) Same config but with fusion disabled: exercises the standalone lane-dense
    #    output-qdq epilogue kernel.
    wrapper.fuse_out_max_n = 0
    y_q3 = jax.block_until_ready(wrapper(x))
    assert jnp.allclose(y_q3, y_q2_ref, atol=6e-2, rtol=2e-2), \
        float(jnp.max(jnp.abs(y_q3 - y_q2_ref)))
    wrapper.fuse_out_max_n = 2048

    # 5) Ragged T/K/N requiring padding, default (generation-aware) tiles,
    #    8-bit symmetric per-tensor input quant.
    T2, K2, N2 = 14, 200, 96
    xr = jax.random.normal(kx2, (T2, K2), jnp.float32)
    wr = jax.random.normal(kw2, (N2, K2), jnp.float32) * 0.05
    br = jax.random.normal(kb2, (N2,), jnp.float32) * 0.1
    wrapper2 = ActQuantWrapper(wr, br)
    wrapper2.configure_input(bits=8, sym=True, clip_ratio=1.0, act_quant="per-tensor")
    y_p = jax.block_until_ready(wrapper2(xr))
    y_p_ref = reference_forward(xr, wr, br, wrapper2.in_cfg, wrapper2.out_cfg)
    assert y_p.shape == (T2, N2)
    assert jnp.allclose(y_p, y_p_ref, atol=2e-2, rtol=2e-2), \
        float(jnp.max(jnp.abs(y_p - y_p_ref)))

    print("KERNEL_OK")
</pallas_src>

<mosaic_0001>
module attributes {stable_mosaic.version = 11 : i64} {
  func.func @kernel(%arg0: i32, %arg1: i32, %arg2: i32, %arg3: memref<16x128xf32, #tpu.memory_space<vmem>>, %arg4: memref<128x128xf32, #tpu.memory_space<vmem>>, %arg5: memref<1x128xf32, #tpu.memory_space<vmem>>, %arg6: memref<16x128xf32, #tpu.memory_space<vmem>>, %arg7: memref<16x128xf32, #tpu.memory_space<vmem>>) attributes {dimension_semantics = [#tpu.dimension_semantics<parallel>, #tpu.dimension_semantics<parallel>, #tpu.dimension_semantics<arbitrary>], iteration_bounds = array<i64: 1, 2, 2>, scalar_prefetch = 0 : i64, scratch_operands = 1 : i64, tpu.core_type = #tpu.core_type<tc>, window_params = [{transform_indices = @transform_0, window_bounds = array<i64: 16, 128>}, {transform_indices = @transform_1, window_bounds = array<i64: 128, 128>}, {transform_indices = @transform_2, window_bounds = array<i64: 1, 128>}, {transform_indices = @transform_3, window_bounds = array<i64: 16, 128>}]} {
    %c0_i32 = arith.constant 0 : i32
    %0 = arith.cmpi eq, %arg2, %c0_i32 : i32
    %1 = arith.extui %0 : i1 to i32
    %c0_i32_0 = arith.constant 0 : i32
    %2 = arith.cmpi ne, %1, %c0_i32_0 : i32
    scf.if %2 {
      %cst_9 = arith.constant 0.000000e+00 : f32
      %12 = vector.broadcast %cst_9 : f32 to vector<16x128xf32>
      %c0_10 = arith.constant 0 : index
      %c0_11 = arith.constant 0 : index
      %13 = vector.load %arg7[%c0_10, %c0_11] : memref<16x128xf32, #tpu.memory_space<vmem>>, vector<16x128xf32>
      tpu.vector_store %arg7[%c0_10, %c0_11], %12 {strides = array<i32>} : memref<16x128xf32, #tpu.memory_space<vmem>>, vector<16x128xf32>,
    } else {
    }
    %c0 = arith.constant 0 : index
    %c0_1 = arith.constant 0 : index
    %3 = vector.load %arg7[%c0, %c0_1] : memref<16x128xf32, #tpu.memory_space<vmem>>, vector<16x128xf32>
    %c0_2 = arith.constant 0 : index
    %c0_3 = arith.constant 0 : index
    %4 = vector.load %arg3[%c0_2, %c0_3] : memref<16x128xf32, #tpu.memory_space<vmem>>, vector<16x128xf32>
    %c0_4 = arith.constant 0 : index
    %c0_5 = arith.constant 0 : index
    %5 = vector.load %arg4[%c0_4, %c0_5] : memref<128x128xf32, #tpu.memory_space<vmem>>, vector<128x128xf32>
    %cst = arith.constant dense<0.000000e+00> : vector<16x128xf32>
    %6 = tpu.matmul %4, %5, %cst {dimension_numbers = #tpu.dot_dimension_numbers<[1], [0], [0], [1], [0, 0, 1, 1], [], []>} : vector<16x128xf32>, vector<128x128xf32>, vector<16x128xf32> -> vector<16x128xf32>
    %7 = arith.addf %3, %6 : vector<16x128xf32>
    %c0_6 = arith.constant 0 : index
    %c0_7 = arith.constant 0 : index
    %8 = vector.load %arg7[%c0_6, %c0_7] : memref<16x128xf32, #tpu.memory_space<vmem>>, vector<16x128xf32>
    tpu.vector_store %arg7[%c0_6, %c0_7], %7 {strides = array<i32>} : memref<16x128xf32, #tpu.memory_space<vmem>>, vector<16x128xf32>,
    %c1_i32 = arith.constant 1 : i32
    %9 = arith.cmpi eq, %arg2, %c1_i32 : i32
    %10 = arith.extui %9 : i1 to i32
    %c0_i32_8 = arith.constant 0 : i32
    %11 = arith.cmpi ne, %10, %c0_i32_8 : i32
    scf.if %11 {
      %c0_9 = arith.constant 0 : index
      %c0_10 = arith.constant 0 : index
      %12 = vector.load %arg7[%c0_9, %c0_10] : memref<16x128xf32, #tpu.memory_space<vmem>>, vector<16x128xf32>
      %c0_11 = arith.constant 0 : index
      %c0_12 = arith.constant 0 : index
      %13 = vector.load %arg5[%c0_11, %c0_12] : memref<1x128xf32, #tpu.memory_space<vmem>>, vector<1x128xf32>
      %14 = vector.broadcast %13 : vector<1x128xf32> to vector<16x128xf32>
      %15 = arith.addf %12, %14 : vector<16x128xf32>
      %c0_13 = arith.constant 0 : index
      %c0_14 = arith.constant 0 : index
      %16 = vector.load %arg6[%c0_13, %c0_14] : memref<16x128xf32, #tpu.memory_space<vmem>>, vector<16x128xf32>
      tpu.vector_store %arg6[%c0_13, %c0_14], %15 {strides = array<i32>} : memref<16x128xf32, #tpu.memory_space<vmem>>, vector<16x128xf32>,
    } else {
    }
    return
  }
  func.func @transform_0(%arg0: i32, %arg1: i32, %arg2: i32) -> (i32, i32) {
    %c0_i32 = arith.constant 0 : i32
    return %arg0, %arg2 : i32, i32
  }
  func.func @transform_1(%arg0: i32, %arg1: i32, %arg2: i32) -> (i32, i32) {
    %c0_i32 = arith.constant 0 : i32
    return %arg2, %arg1 : i32, i32
  }
  func.func @transform_2(%arg0: i32, %arg1: i32, %arg2: i32) -> (i32, i32) {
    %c0_i32 = arith.constant 0 : i32
    %c0_i32_0 = arith.constant 0 : i32
    return %c0_i32, %arg1 : i32, i32
  }
  func.func @transform_3(%arg0: i32, %arg1: i32, %arg2: i32) -> (i32, i32) {
    %c0_i32 = arith.constant 0 : i32
    return %arg0, %arg1 : i32, i32
  }
}

</mosaic_0001>

<llo_original>
// kernel: tpu_custom_call.1
$region0: #{tpu_custom_call.1}
  #allocation0 [shape = 'u32[]', space=smem, size = 0x4, offset = 0x4, fixed_abs, tag = 'smem constant byte address 0x4 - core index']
  #allocation1 [shape = 'u32[144,128]{1,0:T(1,128)}', space=vmem, size = 0x12000, scoped, tag = 'internal scratch']
  #allocation2 [shape = 'f32[16,128]{1,0:T(8,128)}', space=vmem, size = 0x2000, scoped, tag = 'scratch operand']
  %s0 = inlined_call_operand.hbm [shape: f32[16,256], index: 0, kind: input, shape index: {}]
  %s1 = inlined_call_operand.hbm [shape: f32[256,256], index: 1, kind: input, shape index: {}]
  %s2 = inlined_call_operand.vmem [shape: f32[1,256], index: 2, kind: input, shape index: {}]
  %s3 = inlined_call_operand.hbm [shape: f32[16,256], index: 3, kind: output, shape index: {}]
  %s4 = sld [smem:[#allocation0]]
  $region61: #{tpu_custom_call.1} parent=0
    _
  %s6 = ssub.s32 1, %s4
  %s7 = scalar_select 0, %s6, %s4
  $region1: #{tpu_custom_call.1} parent=0
    #allocation3 [shape = 'u8[16384]{0}', space=vmem, size = 0x4000, scoped, tag = 'input window, operand 0']
    #allocation4 [shape = 's32[2]{0}', space=sflag, size = 0x8, scoped, tag = 'scoped memory for tpu_custom_call.1']
    #allocation5 [shape = 's32[2]{0}', space=sflag, size = 0x8, scoped, tag = 'scoped memory for tpu_custom_call.1']
    #allocation6 [shape = 'u8[131072]{0}', space=vmem, size = 0x20000, scoped, tag = 'input window, operand 1']
    #allocation7 [shape = 's32[2]{0}', space=sflag, size = 0x8, scoped, tag = 'scoped memory for tpu_custom_call.1']
    #allocation8 [shape = 'u8[16384]{0}', space=vmem, size = 0x4000, scoped, tag = 'output window, operand 0']
    %8 = vsyncpa [#allocation4], 0
    %s9 = scalar_lea.sflag [#allocation4], 1
    %10 = vsyncpa %s9, 0
    %11 = vsyncpa [#allocation7], 0
    %s12 = scalar_lea.sflag [#allocation7], 1
    %13 = vsyncpa %s12, 0
    %14 = vsyncpa [#allocation5], 0
    %s15 = scalar_lea.sflag [#allocation5], 1
    %16 = vsyncpa %s15, 0
    loop: start=0, step=1, limit=6
    $region2: #{tpu_custom_call.1} parent=1 // loop_pre_header
      _
    $region3: #{tpu_custom_call.1} parent=1 // loop_header
      %s18 = sphi 0, %s22
      %p19 = scmp.ge.s32.totalorder %s18, 6
      %s25 = sphi 0, %s44
      %s26 = sphi 0, %s40
      %s27 = sphi 0, %s36
      %s28 = sphi 0, %s25
      %s29 = sphi 0, %s26
      %s30 = sphi 0, %s27
      %s31 = sphi 0, %s28
      %s32 = sphi 0, %s29
      %s33 = sphi 0, %s30
      %s49 = sphi 0, %s51
      %s52 = sphi 0, %s49
      %s53 = sphi 0, %s52
      %s69 = sphi 0, %s53
      %s77 = sphi 0, %s79
      %s80 = sphi 0, %s77
      %s81 = sphi 0, %s80
      %s97 = sphi 0, %s81
      %s103 = sphi 0, %s105
      %s106 = sphi 0, %s103
      %s107 = sphi 0, %s106
      %s123 = sphi 0, %s107
      %s131 = sphi 0, %s133
      %s134 = sphi 0, %s131
      %s135 = sphi 0, %s134
      %s151 = sphi 0, %s135
    $region4: #{tpu_custom_call.1} parent=1 // loop_header_branch
      %21 = sbr.rel (%p19) target = $region8
    $region5: #{tpu_custom_call.1} parent=1 // loop_body
      %s23 = ssub.s32 %s18, 1
      %s24 = ssub.s32 %s18, 2
      %s34 = sadd.s32 1, %s27
      %p35 = scmp.ge.s32.totalorder %s34, 2
      %s36 = scalar_select %p35, 0, %s34
      %s37 = sadd.s32 1, %s26
      %s38 = scalar_select %p35, %s37, %s26
      %p39 = scmp.ge.s32.totalorder %s38, 2
      %s40 = scalar_select %p39, 0, %s38
      %s41 = sadd.s32 1, %s25
      %s42 = scalar_select %p39, %s41, %s25
      %p43 = scmp.ge.s32.totalorder %s42, 1
      %s44 = scalar_select %p43, 0, %s42
      %s45 = ssub.s32 %s25, %s44
      %s46 = ssub.s32 %s27, %s36
      %s47 = sor.u32 %s45, %s46
      %p48 = scmp.eq.s32.totalorder %s47, 0
      %s50 = sadd.s32 %s49, 1
      %s51 = scalar_select %p48, %s49, %s50
      %p54 = pneg %p48
      %p55 = scmp.eq.s32.totalorder %s18, 3
      %p56 = por %p54, %p55
      %p57 = scmp.ne.s32.totalorder %s49, %s52
      %p58 = scmp.eq.s32.totalorder %s18, 0
      %p59 = por %p57, %p58
      %p60 = scmp.ne.s32.totalorder %s49, %s52
      %p61 = scmp.eq.s32.totalorder %s23, 3
      %p62 = por %p60, %p61
      %p63 = scmp.ne.s32.totalorder %s52, %s53
      %p64 = scmp.eq.s32.totalorder %s23, 0
      %p65 = por %p63, %p64
      %p66 = scmp.ne.s32.totalorder %s52, %s53
      %p67 = scmp.eq.s32.totalorder %s24, 3
      %p68 = por %p66, %p67
      %p70 = scmp.ne.s32.totalorder %s53, %s69
      %p71 = scmp.eq.s32.totalorder %s24, 0
      %p72 = por %p70, %p71
      %s73 = ssub.s32 %s27, %s36
      %s74 = ssub.s32 %s26, %s40
      %s75 = sor.u32 %s73, %s74
      %p76 = scmp.eq.s32.totalorder %s75, 0
      %s78 = sadd.s32 %s77, 1
      %s79 = scalar_select %p76, %s77, %s78
      %p82 = pneg %p76
      %p83 = scmp.eq.s32.totalorder %s18, 3
      %p84 = por %p82, %p83
      %p85 = scmp.ne.s32.totalorder %s77, %s80
      %p86 = scmp.eq.s32.totalorder %s18, 0
      %p87 = por %p85, %p86
      %p88 = scmp.ne.s32.totalorder %s77, %s80
      %p89 = scmp.eq.s32.totalorder %s23, 3
      %p90 = por %p88, %p89
      %p91 = scmp.ne.s32.totalorder %s80, %s81
      %p92 = scmp.eq.s32.totalorder %s23, 0
      %p93 = por %p91, %p92
      %p94 = scmp.ne.s32.totalorder %s80, %s81
      %p95 = scmp.eq.s32.totalorder %s24, 3
      %p96 = por %p94, %p95
      %p98 = scmp.ne.s32.totalorder %s81, %s97
      %p99 = scmp.eq.s32.totalorder %s24, 0
      %p100 = por %p98, %p99
      %s101 = ssub.s32 %s26, %s40
      %p102 = scmp.eq.s32.totalorder %s101, 0
      %s104 = sadd.s32 %s103, 1
      %s105 = scalar_select %p102, %s103, %s104
      %p108 = pneg %p102
      %p109 = scmp.eq.s32.totalorder %s18, 3
      %p110 = por %p108, %p109
      %p111 = scmp.ne.s32.totalorder %s103, %s106
      %p112 = scmp.eq.s32.totalorder %s18, 0
      %p113 = por %p111, %p112
      %p114 = scmp.ne.s32.totalorder %s103, %s106
      %p115 = scmp.eq.s32.totalorder %s23, 3
      %p116 = por %p114, %p115
      %p117 = scmp.ne.s32.totalorder %s106, %s107
      %p118 = scmp.eq.s32.totalorder %s23, 0
      %p119 = por %p117, %p118
      %p120 = scmp.ne.s32.totalorder %s106, %s107
      %p121 = scmp.eq.s32.totalorder %s24, 3
      %p122 = por %p120, %p121
      %p124 = scmp.ne.s32.totalorder %s107, %s123
      %p125 = scmp.eq.s32.totalorder %s24, 0
      %p126 = por %p124, %p125
      %s127 = ssub.s32 %s25, %s44
      %s128 = ssub.s32 %s26, %s40
      %s129 = sor.u32 %s127, %s128
      %p130 = scmp.eq.s32.totalorder %s129, 0
      %s132 = sadd.s32 %s131, 1
      %s133 = scalar_select %p130, %s131, %s132
      %p136 = pneg %p130
      %p137 = scmp.eq.s32.totalorder %s18, 3
      %p138 = por %p136, %p137
      %p139 = scmp.ne.s32.totalorder %s131, %s134
      %p140 = scmp.eq.s32.totalorder %s18, 0
      %p141 = por %p139, %p140
      %p142 = scmp.ne.s32.totalorder %s131, %s134
      %p143 = scmp.eq.s32.totalorder %s23, 3
      %p144 = por %p142, %p143
      %p145 = scmp.ne.s32.totalorder %s134, %s135
      %p146 = scmp.eq.s32.totalorder %s23, 0
      %p147 = por %p145, %p146
      %p148 = scmp.ne.s32.totalorder %s134, %s135
      %p149 = scmp.eq.s32.totalorder %s24, 3
      %p150 = por %p148, %p149
      %p152 = scmp.ne.s32.totalorder %s135, %s151
      %p153 = scmp.eq.s32.totalorder %s24, 0
      %p154 = por %p152, %p153
      %p155 = scmp.le.s32.totalorder 1, %s18
      %p156 = scmp.lt.s32.totalorder %s18, 5
      %p157 = pnand %p155, %p156
      %p158 = pneg %p157
      // Predicated region
      $region9: #{tpu_custom_call.1} parent=5 // pred_check
        _
      $region10: #{tpu_custom_call.1} parent=5 // pred_check_branch
        %160 = sbr.rel (%p157) target = $region12
      $region11: #{tpu_custom_call.1} parent=5 // pred_region
        %s161 = ssub.s32 %s18, 1
      $region12: #{tpu_custom_call.1} parent=5 // pred_fallthru
        _
      %p162 = scmp.lt.s32.totalorder %s18, 4
      // Predicated region
      $region13: #{tpu_custom_call.1} parent=5 // pred_check
        %p163 = pneg %p162
      $region14: #{tpu_custom_call.1} parent=5 // pred_check_branch
        %165 = sbr.rel (%p163) target = $region16
      $region15: #{tpu_custom_call.1} parent=5 // pred_region
        // Predicated region
        $region17: #{tpu_custom_call.1} parent=15 // pred_check
          %p166 = pneg %p59
        $region18: #{tpu_custom_call.1} parent=15 // pred_check_branch
          %168 = sbr.rel (%p166) target = $region20
        $region19: #{tpu_custom_call.1} parent=15 // pred_region
          %s169 = sand.u32 %s49, 1
          %s170 = scalar_lea.sflag [#allocation4], %s169
          %s171 = sand.u32 %s49, 1
          %s172 = smul.addr %s171, 16
          %s173 = scalar_lea.vmem [#allocation3], %s172
          %s174 = smul.u32 2, %s25
          %s176 = ssub.s32 256, 256
          %177 = vsyncadd %s170, %s176
          %s178 = smul.addr %s174, 2
          %s179 = sadd.s32 %s27, %s178
          %s180 = smul.addr %s179, 128
          %s181 = scalar_lea.hbm %s0, %s180
          %s182 = sshll.u32 %s173, 4
          %s183 = int_to_ptr.vmem [resolvable:$true] %s182
          %188 = dma.hbm_to_vmem [thread:$0]  %s181, 256, %s183, %s170, 256, 128, 8
        $region20: #{tpu_custom_call.1} parent=15 // pred_fallthru
          _
        // Predicated region
        $region21: #{tpu_custom_call.1} parent=15 // pred_check
          %p189 = pneg %p87
        $region22: #{tpu_custom_call.1} parent=15 // pred_check_branch
          %191 = sbr.rel (%p189) target = $region24
        $region23: #{tpu_custom_call.1} parent=15 // pred_region
          %s192 = sand.u32 %s77, 1
          %s193 = scalar_lea.sflag [#allocation7], %s192
          %s194 = sand.u32 %s77, 1
          %s195 = smul.addr %s194, 128
          %s196 = scalar_lea.vmem [#allocation6], %s195
          %s197 = smul.u32 16, %s27
          %s199 = ssub.s32 2048, 2048
          %200 = vsyncadd %s193, %s199
          %s201 = smul.addr %s197, 2
          %s202 = sadd.s32 %s26, %s201
          %s203 = smul.addr %s202, 128
          %s204 = scalar_lea.hbm %s1, %s203
          %s205 = sshll.u32 %s196, 4
          %s206 = int_to_ptr.vmem [resolvable:$true] %s205
          %211 = dma.hbm_to_vmem [thread:$0]  %s204, 2048, %s206, %s193, 256, 128, 8
        $region24: #{tpu_custom_call.1} parent=15 // pred_fallthru
          _
        // Predicated region
        $region25: #{tpu_custom_call.1} parent=15 // pred_check
          %p212 = pneg %p113
        $region26: #{tpu_custom_call.1} parent=15 // pred_check_branch
          %214 = sbr.rel (%p212) target = $region28
        $region27: #{tpu_custom_call.1} parent=15 // pred_region
          %p215 = scmp.lt.s32.totalorder %s26, 1
          %s216 = scalar_select %p215, %s26, 1
          %s217 = scalar_lea.vmem %s2, %s216
        $region28: #{tpu_custom_call.1} parent=15 // pred_fallthru
          _
      $region16: #{tpu_custom_call.1} parent=5 // pred_fallthru
        _
      %p218 = scmp.le.s32.totalorder 1, %s18
      %p219 = scmp.lt.s32.totalorder %s18, 5
      %p220 = pnand %p218, %p219
      %p221 = pneg %p220
      // Predicated region
      $region29: #{tpu_custom_call.1} parent=5 // pred_check
        _
      $region30: #{tpu_custom_call.1} parent=5 // pred_check_branch
        %223 = sbr.rel (%p220) target = $region32
      $region31: #{tpu_custom_call.1} parent=5 // pred_region
        %s224 = ssub.s32 %s18, 1
        %s225 = sand.u32 %s52, 1
        %s226 = scalar_lea.sflag [#allocation4], %s225
        %s227 = sand.u32 %s52, 1
        %s228 = smul.addr %s227, 16
        %s229 = scalar_lea.vmem [#allocation3], %s228
        // Predicated region
        $region33: #{tpu_custom_call.1} parent=31 // pred_check
          %p230 = pneg %p65
        $region34: #{tpu_custom_call.1} parent=31 // pred_check_branch
          %232 = sbr.rel (%p230) target = $region36
        $region35: #{tpu_custom_call.1} parent=31 // pred_region
          %233 = dma.done %s226, 256
        $region36: #{tpu_custom_call.1} parent=31 // pred_fallthru
          _
        %s234 = sand.u32 %s80, 1
        %s235 = scalar_lea.sflag [#allocation7], %s234
        %s236 = sand.u32 %s80, 1
        %s237 = smul.addr %s236, 128
        %s238 = scalar_lea.vmem [#allocation6], %s237
        // Predicated region
        $region37: #{tpu_custom_call.1} parent=31 // pred_check
          %p239 = pneg %p93
        $region38: #{tpu_custom_call.1} parent=31 // pred_check_branch
          %241 = sbr.rel (%p239) target = $region40
        $region39: #{tpu_custom_call.1} parent=31 // pred_region
          %242 = dma.done %s235, 2048
        $region40: #{tpu_custom_call.1} parent=31 // pred_fallthru
          _
        %s243 = sand.u32 %s52, 1
        %s244 = scalar_lea.sflag [#allocation4], %s243
        %s245 = sand.u32 %s52, 1
        %s246 = smul.addr %s245, 16
        %s247 = scalar_lea.vmem [#allocation3], %s246
        %p248 = pneg %p65
        %p249 = pneg %p62
        %s250 = sand.u32 %s80, 1
        %s251 = scalar_lea.sflag [#allocation7], %s250
        %s252 = sand.u32 %s80, 1
        %s253 = smul.addr %s252, 128
        %s254 = scalar_lea.vmem [#allocation6], %s253
        %p255 = pneg %p93
        %p256 = pneg %p90
        %p257 = scmp.lt.s32.totalorder %s29, 1
        %s258 = scalar_select %p257, %s29, 1
        %s259 = scalar_lea.vmem %s2, %s258
        %p260 = pneg %p119
        %p261 = pneg %p116
        %p262 = pneg %p147
        %p263 = pneg %p144
        %s264 = sand.u32 %s134, 1
        %s265 = scalar_lea.sflag [#allocation5], %s264
        %s266 = sand.u32 %s134, 1
        %s267 = smul.addr %s266, 16
        %s268 = scalar_lea.vmem [#allocation8], %s267
        %s269 = smul.u32 2, %s28
        %s270 = smul.u32 16, %s30
        %p271 = scmp.lt.s32.totalorder %s29, 1
        %s272 = scalar_select %p271, %s29, 1
        %s273 = scalar_lea.vmem %s2, %s272
        %s274 = smul.u32 2, %s28
        %p275 = scmp.eq.s32.totalorder %s30, 0
        // Predicated region
        $region41: #{tpu_custom_call.1} parent=31 // pred_check
          %p276 = pneg %p275
        $region42: #{tpu_custom_call.1} parent=31 // pred_check_branch
          %278 = sbr.rel (%p276) target = $region44
        $region43: #{tpu_custom_call.1} parent=31 // pred_region
          %279 = vst [vmem:[#allocation2] sm:$0xff] 0.0
          %280 = vst [vmem:[#allocation2 + $0x8] sm:$0xff] 0.0
        $region44: #{tpu_custom_call.1} parent=31 // pred_fallthru
          _
        %v281 = vld [vmem:[#allocation2] sm:$0xff]
        %v282 = vld [vmem:[#allocation2 + $0x8] sm:$0xff]
        %v283 = vld [vmem:[%s229] sm:$0xff]
        %v284 = vld [vmem:[%s229 + $0x8] sm:$0xff]
        %v285 = vld [vmem:[%s238] sm:$0xff]
        %v286 = vld [vmem:[%s238 + $0x8] sm:$0xff]
        %v287 = vld [vmem:[%s238 + $0x10] sm:$0xff]
        %v288 = vld [vmem:[%s238 + $0x18] sm:$0xff]
        %v289 = vld [vmem:[%s238 + $0x20] sm:$0xff]
        %v290 = vld [vmem:[%s238 + $0x28] sm:$0xff]
        %v291 = vld [vmem:[%s238 + $0x30] sm:$0xff]
        %v292 = vld [vmem:[%s238 + $0x38] sm:$0xff]
        %v293 = vld [vmem:[%s238 + $0x40] sm:$0xff]
        %v294 = vld [vmem:[%s238 + $0x48] sm:$0xff]
        %v295 = vld [vmem:[%s238 + $0x50] sm:$0xff]
        %v296 = vld [vmem:[%s238 + $0x58] sm:$0xff]
        %v297 = vld [vmem:[%s238 + $0x60] sm:$0xff]
        %v298 = vld [vmem:[%s238 + $0x68] sm:$0xff]
        %v299 = vld [vmem:[%s238 + $0x70] sm:$0xff]
        %v300 = vld [vmem:[%s238 + $0x78] sm:$0xff]
        %301 = vmatprep.subr.mxu0 0.0
        %302 = vmatpush1.msra.mxu0 %v285
        %303 = vmatprep.subr.mxu0 0.0
        %304 = vmatpush1.msra.mxu0 %v286
        %305 = vmatprep.subr.mxu0 0.0
        %306 = vmatpush1.msra.mxu0 %v287
        %307 = vmatprep.subr.mxu0 0.0
        %308 = vmatpush1.msra.mxu0 %v288
        %309 = vmatprep.subr.mxu0 0.0
        %310 = vmatpush1.msra.mxu0 %v289
        %311 = vmatprep.subr.mxu0 0.0
        %312 = vmatpush1.msra.mxu0 %v290
        %313 = vmatprep.subr.mxu0 0.0
        %314 = vmatpush1.msra.mxu0 %v291
        %315 = vmatprep.subr.mxu0 0.0
        %316 = vmatpush1.msra.mxu0 %v292
        %317 = vmatprep.subr.mxu0 0.0
        %318 = vmatpush1.msra.mxu0 %v293
        %319 = vmatprep.subr.mxu0 0.0
        %320 = vmatpush1.msra.mxu0 %v294
        %321 = vmatprep.subr.mxu0 0.0
        %322 = vmatpush1.msra.mxu0 %v295
        %323 = vmatprep.subr.mxu0 0.0
        %324 = vmatpush1.msra.mxu0 %v296
        %325 = vmatprep.subr.mxu0 0.0
        %326 = vmatpush1.msra.mxu0 %v297
        %327 = vmatprep.subr.mxu0 0.0
        %328 = vmatpush1.msra.mxu0 %v298
        %329 = vmatprep.subr.mxu0 0.0
        %330 = vmatpush1.msra.mxu0 %v299
        %331 = vmatprep.subr.mxu0 0.0
        %332 = vmatpush1.msra.mxu0 %v300
        %333 = vmatprep.subr.mxu0 0.0
        %334 = vmatpush1.msra.mxu0 0.0
        %335 = vmatprep.subr.mxu0 0.0
        %336 = vmatpush1.msra.mxu0 0.0
        %337 = vmatprep.subr.mxu0 0.0
        %338 = vmatpush1.msra.mxu0 0.0
        %339 = vmatprep.subr.mxu0 0.0
        %340 = vmatpush1.msra.mxu0 0.0
        %341 = vmatprep.subr.mxu0 0.0
        %342 = vmatpush1.msra.mxu0 0.0
        %343 = vmatprep.subr.mxu0 0.0
        %344 = vmatpush1.msra.mxu0 0.0
        %345 = vmatprep.subr.mxu0 0.0
        %346 = vmatpush1.msra.mxu0 0.0
        %347 = vmatprep.subr.mxu0 0.0
        %348 = vmatpush1.msra.mxu0 0.0
        %349 = vmatprep.subr.mxu0 0.0
        %350 = vmatpush1.msra.mxu0 0.0
        %351 = vmatprep.subr.mxu0 0.0
        %352 = vmatpush1.msra.mxu0 0.0
        %353 = vmatprep.subr.mxu0 0.0
        %354 = vmatpush1.msra.mxu0 0.0
        %355 = vmatprep.subr.mxu0 0.0
        %356 = vmatpush1.msra.mxu0 0.0
        %357 = vmatprep.subr.mxu0 0.0
        %358 = vmatpush1.msra.mxu0 0.0
        %359 = vmatprep.subr.mxu0 0.0
        %360 = vmatpush1.msra.mxu0 0.0
        %361 = vmatprep.subr.mxu0 0.0
        %362 = vmatpush1.msra.mxu0 0.0
        %363 = vmatprep.subr.mxu0 0.0
        %364 = vmatpush1.msra.mxu0 0.0
        %365 = vmatprep.mubr.f32.mxu0 0.0
        %366 = vmatmul.mubr.f32.gmra.mrb[0].mxu0 %v283
        %v367 = vpop.f32.mrb[0].mxu0
        %v368 = vadd.f32 0.0, %v367
        %v369 = vpop.f32.mrb[0].mxu0
        %370 = vmatprep.mubr.f32.mxu0 0.0
        %371 = vmatmul.mubr.f32.gmra.mrb[0].mxu0 %v284
        %v372 = vpop.f32.mrb[0].mxu0
        %v373 = vadd.f32 0.0, %v372
        %v374 = vpop.f32.mrb[0].mxu0
        %375 = vdwg.mxu0
        %v376 = vadd.f32 %v281, %v368
        %v377 = vadd.f32 %v282, %v373
        %378 = vst [vmem:[#allocation2] sm:$0xff] %v376
        %379 = vst [vmem:[#allocation2 + $0x8] sm:$0xff] %v377
        %p380 = scmp.eq.s32.totalorder %s30, 1
        // Predicated region
        $region45: #{tpu_custom_call.1} parent=31 // pred_check
          %p381 = pneg %p380
        $region46: #{tpu_custom_call.1} parent=31 // pred_check_branch
          %383 = sbr.rel (%p381) target = $region48
        $region47: #{tpu_custom_call.1} parent=31 // pred_region
          %v384 = vld [vmem:[#allocation2] sm:$0xff]
          %v385 = vld [vmem:[#allocation2 + $0x8] sm:$0xff]
          %v386 = vld [vmem:[%s273] sm:$0x1]
          %v388 = vlaneseq
          %v389 = vshrl.u32 %v388, 7
          %v390 = vsub.s32 0, %v389
          %v391 = vrot.slane %v386, %v390
          %v393 = vadd.f32 %v384, %v391
          %v394 = vadd.f32 %v385, %v391
          %395 = vst [vmem:[%s268] sm:$0xff] %v393
          %396 = vst [vmem:[%s268 + $0x8] sm:$0xff] %v394
        $region48: #{tpu_custom_call.1} parent=31 // pred_fallthru
          _
        %s397 = sand.u32 %s134, 1
        %s398 = scalar_lea.sflag [#allocation5], %s397
        %s399 = sand.u32 %s134, 1
        %s400 = smul.addr %s399, 16
        %s401 = scalar_lea.vmem [#allocation8], %s400
        // Predicated region
        $region49: #{tpu_custom_call.1} parent=31 // pred_check
          %p402 = pneg %p144
        $region50: #{tpu_custom_call.1} parent=31 // pred_check_branch
          %404 = sbr.rel (%p402) target = $region52
        $region51: #{tpu_custom_call.1} parent=31 // pred_region
          %s405 = smul.u32 2, %s28
          %s407 = ssub.s32 256, 256
          %408 = vsyncadd %s398, %s407
          %s409 = smul.addr %s405, 2
          %s410 = sadd.s32 %s29, %s409
          %s411 = smul.addr %s410, 128
          %s412 = scalar_lea.hbm %s3, %s411
          %s413 = sshll.u32 %s401, 4
          %s414 = int_to_ptr.vmem [resolvable:$true] %s413
          %419 = dma.vmem_to_hbm [thread:$0]  %s414, 256, %s412, %s398, 128, 256, 8
        $region52: #{tpu_custom_call.1} parent=31 // pred_fallthru
          _
      $region32: #{tpu_custom_call.1} parent=5 // pred_fallthru
        _
      %p420 = scmp.le.s32.totalorder 2, %s18
      // Predicated region
      $region53: #{tpu_custom_call.1} parent=5 // pred_check
        %p421 = pneg %p420
      $region54: #{tpu_custom_call.1} parent=5 // pred_check_branch
        %423 = sbr.rel (%p421) target = $region56
      $region55: #{tpu_custom_call.1} parent=5 // pred_region
        %s424 = ssub.s32 %s18, 2
        // Predicated region
        $region57: #{tpu_custom_call.1} parent=55 // pred_check
          %p425 = pneg %p150
        $region58: #{tpu_custom_call.1} parent=55 // pred_check_branch
          %427 = sbr.rel (%p425) target = $region60
        $region59: #{tpu_custom_call.1} parent=55 // pred_region
          %s428 = sand.u32 %s135, 1
          %s429 = scalar_lea.sflag [#allocation5], %s428
          %s430 = sand.u32 %s135, 1
          %s431 = smul.addr %s430, 16
          %s432 = scalar_lea.vmem [#allocation8], %s431
          %433 = dma.done %s429, 256
        $region60: #{tpu_custom_call.1} parent=55 // pred_fallthru
          _
      $region56: #{tpu_custom_call.1} parent=5 // pred_fallthru
        _
    $region6: #{tpu_custom_call.1} parent=1 // loop_footer
      %s22 = sadd.s32 1, %s18
    $region7: #{tpu_custom_call.1} parent=1 // loop_footer_branch
      %17 = sbr.rel target = $region3
    $region8: #{tpu_custom_call.1} parent=1 // loop_exit
      _
    %434 = vsyncpa [#allocation4], 1
    %s435 = scalar_lea.sflag [#allocation4], 1
    %436 = vsyncpa %s435, 1
    %437 = vsyncpa [#allocation7], 1
    %s438 = scalar_lea.sflag [#allocation7], 1
    %439 = vsyncpa %s438, 1
    %440 = vsyncpa [#allocation5], 1
    %s441 = scalar_lea.sflag [#allocation5], 1
    %442 = vsyncpa %s441, 1

</llo_original>
